<compile_context>
chip_gen: v7x
topology: tpu7x:2x2x1
jax: 0.10.0
libtpu: 0.0.40
codegen_flags: <defaults>
</compile_context>

<pallas_src>
import numpy as np
import jax
import jax.numpy as jnp
from jax.experimental import pallas as pl
from jax.experimental.pallas import tpu as pltpu


# ----------------------------------------------------------------------------
# Bilinear interpolation matrices (PyTorch align_corners=False semantics).
# ----------------------------------------------------------------------------
def _bilinear_matrix(out_size: int, in_size: int) -> np.ndarray:
    """A (out_size, in_size) matrix A s.t. y = A @ x is 1-D bilinear resize."""
    A = np.zeros((out_size, in_size), dtype=np.float32)
    scale = in_size / out_size
    for i in range(out_size):
        src = (i + 0.5) * scale - 0.5
        if src < 0.0:          # PyTorch clamps negative source index to 0
            src = 0.0
        i0 = int(np.floor(src))
        i0 = min(i0, in_size - 1)
        i1 = min(i0 + 1, in_size - 1)
        lam = src - i0
        A[i, i0] += 1.0 - lam
        A[i, i1] += lam
    return A


def _pick_tile(n: int, preferred: int, quantum: int) -> int:
    """Largest divisor of n that is <= preferred and a multiple of quantum,
    else n itself (full dim is always a legal block size)."""
    if n <= preferred:
        return n
    t = (preferred // quantum) * quantum
    while t >= quantum:
        if n % t == 0:
            return t
        t -= quantum
    return n


# ----------------------------------------------------------------------------
# Kernel
# ----------------------------------------------------------------------------
def _spatial_prompt_in_kernel(x_ref, p_ref, m_ref, out_ref):
    # x_ref:   (1, Ct, Thw)    input tile, NCHW flattened over H*W
    # p_ref:   (1, Cpb, hw)    prompt tile, flattened over h*w (Cpb = Ct or 1)
    # m_ref:   (hw, Thw)       bilinear interpolation matrix tile (kron^T)
    # out_ref: (1, Ct, Thw)
    p = p_ref[0]                                                   # (Cpb, hw)
    interp = jnp.dot(p, m_ref[...],
                     preferred_element_type=jnp.float32)           # (Cpb, Thw)
    gate = jax.nn.sigmoid(interp)                                  # lane-dense
    x = x_ref[0]                                                   # (Ct, Thw)
    out_ref[0] = (x * (1.0 + gate)).astype(out_ref.dtype)


# ----------------------------------------------------------------------------
# Wrapper
# ----------------------------------------------------------------------------
def spatial_prompt_in(x_nchw, prompt_nchw, *, hw_tile=None, c_tile=None):
    B, C, H, W = x_nchw.shape
    Bp, Cp, h, w = prompt_nchw.shape
    assert Bp == B and Cp in (1, C), "prompt channels must be 1 or C"
    HW, hw = H * W, h * w

    # Free views only -- no transposes, NCHW stays NCHW.
    x_r = x_nchw.reshape(B, C, HW)
    p_r = prompt_nchw.reshape(B, Cp, hw)

    # Precompute the bilinear-resize matrix once (outside the kernel).
    Ay = _bilinear_matrix(H, h)                     # (H, h)
    Ax = _bilinear_matrix(W, w)                     # (W, w)
    Mt = jnp.asarray(np.kron(Ay, Ax).T)             # (h*w, H*W)

    # Tile sizes: lane (HW) tiles in multiples of 128, channel tiles in 8s.
    Thw = hw_tile if hw_tile is not None else _pick_tile(HW, 4096, 128)
    Ct = c_tile if c_tile is not None else _pick_tile(C, 32, 8)
    assert HW % Thw == 0 and (Thw % 128 == 0 or Thw == HW)
    assert C % Ct == 0 and (Ct % 8 == 0 or Ct == C)

    Cpb = Ct if Cp == C else 1
    if Cp == C:
        p_index = lambda b, ci, hi: (b, ci, 0)
    else:
        p_index = lambda b, ci, hi: (b, 0, 0)

    grid = (B, C // Ct, HW // Thw)

    out = pl.pallas_call(
        _spatial_prompt_in_kernel,
        out_shape=jax.ShapeDtypeStruct((B, C, HW), jnp.float32),
        grid=grid,
        in_specs=[
            pl.BlockSpec((1, Ct, Thw), lambda b, ci, hi: (b, ci, hi)),   # x
            pl.BlockSpec((1, Cpb, hw), p_index),                         # prompt
            pl.BlockSpec((hw, Thw), lambda b, ci, hi: (0, hi)),          # M^T
        ],
        out_specs=pl.BlockSpec((1, Ct, Thw), lambda b, ci, hi: (b, ci, hi)),
        compiler_params=pltpu.CompilerParams(
            dimension_semantics=("parallel", "parallel", "parallel")),
    )(x_r, p_r, Mt)

    return out.reshape(B, C, H, W)


# ----------------------------------------------------------------------------
# Pure-JAX reference reproducing PyTorch F.interpolate(bilinear, ac=False)
# via explicit per-pixel gathers (independent of the kron construction).
# ----------------------------------------------------------------------------
def reference_forward(x, prompt):
    B, C, H, W = x.shape
    _, Cp, h, w = prompt.shape

    def src_idx(out_size, in_size):
        i = jnp.arange(out_size, dtype=jnp.float32)
        s = (i + 0.5) * (in_size / out_size) - 0.5
        s = jnp.maximum(s, 0.0)
        i0 = jnp.clip(jnp.floor(s).astype(jnp.int32), 0, in_size - 1)
        i1 = jnp.minimum(i0 + 1, in_size - 1)
        lam = s - i0.astype(jnp.float32)
        return i0, i1, lam

    y0, y1, ly = src_idx(H, h)
    x0, x1, lx = src_idx(W, w)
    top = (prompt[:, :, y0, :] * (1.0 - ly)[None, None, :, None]
           + prompt[:, :, y1, :] * ly[None, None, :, None])          # (B,Cp,H,w)
    interp = top[:, :, :, x0] * (1.0 - lx) + top[:, :, :, x1] * lx   # (B,Cp,H,W)
    gate = jax.nn.sigmoid(interp)
    return x + x * gate


if __name__ == "__main__":
    B, C, H, W = 2, 4, 16, 16
    h, w = 8, 8

    key = jax.random.PRNGKey(0)
    kx, kp, kq = jax.random.split(key, 3)
    x = jax.random.normal(kx, (B, C, H, W), dtype=jnp.float32)

    # Case 1: per-channel spatial prompt (Cp == C), HW tiled into 128-lane blocks.
    prompt = jax.random.normal(kp, (B, C, h, w), dtype=jnp.float32)
    out = jax.block_until_ready(spatial_prompt_in(x, prompt, hw_tile=128))
    ref = reference_forward(x, prompt)
    assert out.shape == (B, C, H, W)
    err = float(jnp.max(jnp.abs(out - ref)))
    assert jnp.allclose(out, ref, atol=1e-5, rtol=1e-5), err

    # Case 2: single-channel prompt broadcast across C (default tiling).
    prompt1 = jax.random.normal(kq, (B, 1, h, w), dtype=jnp.float32)
    out1 = jax.block_until_ready(spatial_prompt_in(x, prompt1))
    ref1 = reference_forward(x, prompt1)
    err1 = float(jnp.max(jnp.abs(out1 - ref1)))
    assert jnp.allclose(out1, ref1, atol=1e-5, rtol=1e-5), err1

    print("KERNEL_OK")
</pallas_src>

<mosaic_0001>
module attributes {stable_mosaic.version = 11 : i64} {
  func.func @_spatial_prompt_in_kernel(%arg0: i32, %arg1: i32, %arg2: i32, %arg3: memref<1x4x128xf32, #tpu.memory_space<vmem>>, %arg4: memref<1x4x64xf32, #tpu.memory_space<vmem>>, %arg5: memref<64x128xf32, #tpu.memory_space<vmem>>, %arg6: memref<1x4x128xf32, #tpu.memory_space<vmem>>) attributes {dimension_semantics = [#tpu.dimension_semantics<parallel>, #tpu.dimension_semantics<parallel>, #tpu.dimension_semantics<parallel>], iteration_bounds = array<i64: 2, 1, 2>, scalar_prefetch = 0 : i64, scratch_operands = 0 : i64, tpu.core_type = #tpu.core_type<tc>, window_params = [{transform_indices = @transform_0, window_bounds = array<i64: 1, 4, 128>}, {transform_indices = @transform_1, window_bounds = array<i64: 1, 4, 64>}, {transform_indices = @transform_2, window_bounds = array<i64: 64, 128>}, {transform_indices = @transform_3, window_bounds = array<i64: 1, 4, 128>}]} {
    %c0 = arith.constant 0 : index
    %c0_0 = arith.constant 0 : index
    %c0_1 = arith.constant 0 : index
    %0 = vector.load %arg4[%c0, %c0_0, %c0_1] : memref<1x4x64xf32, #tpu.memory_space<vmem>>, vector<1x4x64xf32>
    %1 = vector.shape_cast %0 : vector<1x4x64xf32> to vector<4x64xf32>
    %c0_2 = arith.constant 0 : index
    %c0_3 = arith.constant 0 : index
    %2 = vector.load %arg5[%c0_2, %c0_3] : memref<64x128xf32, #tpu.memory_space<vmem>>, vector<64x128xf32>
    %cst = arith.constant dense<0.000000e+00> : vector<4x128xf32>
    %3 = tpu.matmul %1, %2, %cst {dimension_numbers = #tpu.dot_dimension_numbers<[1], [0], [0], [1], [0, 0, 1, 1], [], []>} : vector<4x64xf32>, vector<64x128xf32>, vector<4x128xf32> -> vector<4x128xf32>
    %4 = arith.negf %3 : vector<4x128xf32>
    %5 = math.exp %4 : vector<4x128xf32>
    %cst_4 = arith.constant 1.000000e+00 : f32
    %6 = vector.broadcast %cst_4 : f32 to vector<4x128xf32>
    %7 = arith.addf %6, %5 : vector<4x128xf32>
    %8 = arith.divf %6, %7 : vector<4x128xf32>
    %c0_5 = arith.constant 0 : index
    %c0_6 = arith.constant 0 : index
    %c0_7 = arith.constant 0 : index
    %9 = vector.load %arg3[%c0_5, %c0_6, %c0_7] : memref<1x4x128xf32, #tpu.memory_space<vmem>>, vector<1x4x128xf32>
    %10 = vector.shape_cast %9 : vector<1x4x128xf32> to vector<4x128xf32>
    %cst_8 = arith.constant 1.000000e+00 : f32
    %11 = vector.broadcast %cst_8 : f32 to vector<4x128xf32>
    %12 = arith.addf %11, %8 : vector<4x128xf32>
    %13 = arith.mulf %10, %12 : vector<4x128xf32>
    %c0_9 = arith.constant 0 : index
    %c0_10 = arith.constant 0 : index
    %c0_11 = arith.constant 0 : index
    %14 = vector.load %arg6[%c0_9, %c0_10, %c0_11] : memref<1x4x128xf32, #tpu.memory_space<vmem>>, vector<1x4x128xf32>
    %15 = vector.shape_cast %14 : vector<1x4x128xf32> to vector<4x128xf32>
    %16 = vector.shape_cast %13 : vector<4x128xf32> to vector<1x4x128xf32>
    tpu.vector_store %arg6[%c0_9, %c0_10, %c0_11], %16 {strides = array<i32>} : memref<1x4x128xf32, #tpu.memory_space<vmem>>, vector<1x4x128xf32>,
    return
  }
  func.func @transform_0(%arg0: i32, %arg1: i32, %arg2: i32) -> (i32, i32, i32) {
    %c0_i32 = arith.constant 0 : i32
    return %arg0, %arg1, %arg2 : i32, i32, i32
  }
  func.func @transform_1(%arg0: i32, %arg1: i32, %arg2: i32) -> (i32, i32, i32) {
    %c0_i32 = arith.constant 0 : i32
    %c0_i32_0 = arith.constant 0 : i32
    return %arg0, %arg1, %c0_i32 : i32, i32, i32
  }
  func.func @transform_2(%arg0: i32, %arg1: i32, %arg2: i32) -> (i32, i32) {
    %c0_i32 = arith.constant 0 : i32
    %c0_i32_0 = arith.constant 0 : i32
    return %c0_i32, %arg2 : i32, i32
  }
  func.func @transform_3(%arg0: i32, %arg1: i32, %arg2: i32) -> (i32, i32, i32) {
    %c0_i32 = arith.constant 0 : i32
    return %arg0, %arg1, %arg2 : i32, i32, i32
  }
}

</mosaic_0001>

<llo_original>
// kernel: tpu_custom_call.1
$region0: #{tpu_custom_call.1}
  #allocation0 [shape = 'u32[]', space=smem, size = 0x4, offset = 0x4, fixed_abs, tag = 'smem constant byte address 0x4 - core index']
  #allocation1 [shape = 'u32[144,128]{1,0:T(1,128)}', space=vmem, size = 0x12000, scoped, tag = 'internal scratch']
  %s0 = inlined_call_operand.hbm [shape: f32[2,4,256], index: 0, kind: input, shape index: {}]
  %s1 = inlined_call_operand.hbm [shape: f32[2,4,64], index: 1, kind: input, shape index: {}]
  %s2 = inlined_call_operand.hbm [shape: f32[64,256], index: 2, kind: input, shape index: {}]
  %s3 = inlined_call_operand.hbm [shape: f32[2,4,256], index: 3, kind: output, shape index: {}]
  %s4 = sld [smem:[#allocation0]]
  $region57: #{tpu_custom_call.1} parent=0
    _
  %s6 = ssub.s32 1, %s4
  %s7 = scalar_select 0, %s6, %s4
  $region1: #{tpu_custom_call.1} parent=0
    #allocation2 [shape = 'u8[4096]{0}', space=vmem, size = 0x1000, scoped, tag = 'input window, operand 0']
    #allocation3 [shape = 's32[2]{0}', space=sflag, size = 0x8, scoped, tag = 'scoped memory for tpu_custom_call.1']
    #allocation4 [shape = 's32[2]{0}', space=sflag, size = 0x8, scoped, tag = 'scoped memory for tpu_custom_call.1']
    #allocation5 [shape = 'u8[4096]{0}', space=vmem, size = 0x1000, scoped, tag = 'input window, operand 1']
    #allocation6 [shape = 's32[2]{0}', space=sflag, size = 0x8, scoped, tag = 'scoped memory for tpu_custom_call.1']
    #allocation7 [shape = 'u8[65536]{0}', space=vmem, size = 0x10000, scoped, tag = 'input window, operand 2']
    #allocation8 [shape = 'u8[4096]{0}', space=vmem, size = 0x1000, scoped, tag = 'output window, operand 0']
    %8 = vsyncpa [#allocation3], 0
    %s9 = scalar_lea.sflag [#allocation3], 1
    %10 = vsyncpa %s9, 0
    %11 = vsyncpa [#allocation6], 0
    %s12 = scalar_lea.sflag [#allocation6], 1
    %13 = vsyncpa %s12, 0
    %14 = vsyncpa [#allocation4], 0
    %s15 = scalar_lea.sflag [#allocation4], 1
    %16 = vsyncpa %s15, 0
    loop: start=0, step=1, limit=6
    $region2: #{tpu_custom_call.1} parent=1 // loop_pre_header
      _
    $region3: #{tpu_custom_call.1} parent=1 // loop_header
      %s18 = sphi 0, %s22
      %p19 = scmp.ge.s32.totalorder %s18, 6
      %s25 = sphi 0, %s44
      %s26 = sphi 0, %s40
      %s27 = sphi 0, %s36
      %s28 = sphi 0, %s25
      %s29 = sphi 0, %s26
      %s30 = sphi 0, %s27
      %s31 = sphi 0, %s28
      %s32 = sphi 0, %s29
      %s33 = sphi 0, %s30
      %s51 = sphi 0, %s53
      %s54 = sphi 0, %s51
      %s55 = sphi 0, %s54
      %s71 = sphi 0, %s55
      %s79 = sphi 0, %s81
      %s82 = sphi 0, %s79
      %s83 = sphi 0, %s82
      %s99 = sphi 0, %s83
      %s105 = sphi 0, %s107
      %s108 = sphi 0, %s105
      %s109 = sphi 0, %s108
      %s125 = sphi 0, %s109
      %s135 = sphi 0, %s137
      %s138 = sphi 0, %s135
      %s139 = sphi 0, %s138
      %s155 = sphi 0, %s139
    $region4: #{tpu_custom_call.1} parent=1 // loop_header_branch
      %21 = sbr.rel (%p19) target = $region8
    $region5: #{tpu_custom_call.1} parent=1 // loop_body
      %s23 = ssub.s32 %s18, 1
      %s24 = ssub.s32 %s18, 2
      %s34 = sadd.s32 1, %s27
      %p35 = scmp.ge.s32.totalorder %s34, 2
      %s36 = scalar_select %p35, 0, %s34
      %s37 = sadd.s32 1, %s26
      %s38 = scalar_select %p35, %s37, %s26
      %p39 = scmp.ge.s32.totalorder %s38, 1
      %s40 = scalar_select %p39, 0, %s38
      %s41 = sadd.s32 1, %s25
      %s42 = scalar_select %p39, %s41, %s25
      %p43 = scmp.ge.s32.totalorder %s42, 2
      %s44 = scalar_select %p43, 0, %s42
      %s45 = ssub.s32 %s25, %s44
      %s46 = ssub.s32 %s26, %s40
      %s47 = sor.u32 %s45, %s46
      %s48 = ssub.s32 %s27, %s36
      %s49 = sor.u32 %s47, %s48
      %p50 = scmp.eq.s32.totalorder %s49, 0
      %s52 = sadd.s32 %s51, 1
      %s53 = scalar_select %p50, %s51, %s52
      %p56 = pneg %p50
      %p57 = scmp.eq.s32.totalorder %s18, 3
      %p58 = por %p56, %p57
      %p59 = scmp.ne.s32.totalorder %s51, %s54
      %p60 = scmp.eq.s32.totalorder %s18, 0
      %p61 = por %p59, %p60
      %p62 = scmp.ne.s32.totalorder %s51, %s54
      %p63 = scmp.eq.s32.totalorder %s23, 3
      %p64 = por %p62, %p63
      %p65 = scmp.ne.s32.totalorder %s54, %s55
      %p66 = scmp.eq.s32.totalorder %s23, 0
      %p67 = por %p65, %p66
      %p68 = scmp.ne.s32.totalorder %s54, %s55
      %p69 = scmp.eq.s32.totalorder %s24, 3
      %p70 = por %p68, %p69
      %p72 = scmp.ne.s32.totalorder %s55, %s71
      %p73 = scmp.eq.s32.totalorder %s24, 0
      %p74 = por %p72, %p73
      %s75 = ssub.s32 %s25, %s44
      %s76 = ssub.s32 %s26, %s40
      %s77 = sor.u32 %s75, %s76
      %p78 = scmp.eq.s32.totalorder %s77, 0
      %s80 = sadd.s32 %s79, 1
      %s81 = scalar_select %p78, %s79, %s80
      %p84 = pneg %p78
      %p85 = scmp.eq.s32.totalorder %s18, 3
      %p86 = por %p84, %p85
      %p87 = scmp.ne.s32.totalorder %s79, %s82
      %p88 = scmp.eq.s32.totalorder %s18, 0
      %p89 = por %p87, %p88
      %p90 = scmp.ne.s32.totalorder %s79, %s82
      %p91 = scmp.eq.s32.totalorder %s23, 3
      %p92 = por %p90, %p91
      %p93 = scmp.ne.s32.totalorder %s82, %s83
      %p94 = scmp.eq.s32.totalorder %s23, 0
      %p95 = por %p93, %p94
      %p96 = scmp.ne.s32.totalorder %s82, %s83
      %p97 = scmp.eq.s32.totalorder %s24, 3
      %p98 = por %p96, %p97
      %p100 = scmp.ne.s32.totalorder %s83, %s99
      %p101 = scmp.eq.s32.totalorder %s24, 0
      %p102 = por %p100, %p101
      %s103 = ssub.s32 %s27, %s36
      %p104 = scmp.eq.s32.totalorder %s103, 0
      %s106 = sadd.s32 %s105, 1
      %s107 = scalar_select %p104, %s105, %s106
      %p110 = pneg %p104
      %p111 = scmp.eq.s32.totalorder %s18, 3
      %p112 = por %p110, %p111
      %p113 = scmp.ne.s32.totalorder %s105, %s108
      %p114 = scmp.eq.s32.totalorder %s18, 0
      %p115 = por %p113, %p114
      %p116 = scmp.ne.s32.totalorder %s105, %s108
      %p117 = scmp.eq.s32.totalorder %s23, 3
      %p118 = por %p116, %p117
      %p119 = scmp.ne.s32.totalorder %s108, %s109
      %p120 = scmp.eq.s32.totalorder %s23, 0
      %p121 = por %p119, %p120
      %p122 = scmp.ne.s32.totalorder %s108, %s109
      %p123 = scmp.eq.s32.totalorder %s24, 3
      %p124 = por %p122, %p123
      %p126 = scmp.ne.s32.totalorder %s109, %s125
      %p127 = scmp.eq.s32.totalorder %s24, 0
      %p128 = por %p126, %p127
      %s129 = ssub.s32 %s25, %s44
      %s130 = ssub.s32 %s26, %s40
      %s131 = sor.u32 %s129, %s130
      %s132 = ssub.s32 %s27, %s36
      %s133 = sor.u32 %s131, %s132
      %p134 = scmp.eq.s32.totalorder %s133, 0
      %s136 = sadd.s32 %s135, 1
      %s137 = scalar_select %p134, %s135, %s136
      %p140 = pneg %p134
      %p141 = scmp.eq.s32.totalorder %s18, 3
      %p142 = por %p140, %p141
      %p143 = scmp.ne.s32.totalorder %s135, %s138
      %p144 = scmp.eq.s32.totalorder %s18, 0
      %p145 = por %p143, %p144
      %p146 = scmp.ne.s32.totalorder %s135, %s138
      %p147 = scmp.eq.s32.totalorder %s23, 3
      %p148 = por %p146, %p147
      %p149 = scmp.ne.s32.totalorder %s138, %s139
      %p150 = scmp.eq.s32.totalorder %s23, 0
      %p151 = por %p149, %p150
      %p152 = scmp.ne.s32.totalorder %s138, %s139
      %p153 = scmp.eq.s32.totalorder %s24, 3
      %p154 = por %p152, %p153
      %p156 = scmp.ne.s32.totalorder %s139, %s155
      %p157 = scmp.eq.s32.totalorder %s24, 0
      %p158 = por %p156, %p157
      %p159 = scmp.le.s32.totalorder 1, %s18
      %p160 = scmp.lt.s32.totalorder %s18, 5
      %p161 = pnand %p159, %p160
      %p162 = pneg %p161
      // Predicated region
      $region9: #{tpu_custom_call.1} parent=5 // pred_check
        _
      $region10: #{tpu_custom_call.1} parent=5 // pred_check_branch
        %164 = sbr.rel (%p161) target = $region12
      $region11: #{tpu_custom_call.1} parent=5 // pred_region
        %s165 = ssub.s32 %s18, 1
      $region12: #{tpu_custom_call.1} parent=5 // pred_fallthru
        _
      %p166 = scmp.lt.s32.totalorder %s18, 4
      // Predicated region
      $region13: #{tpu_custom_call.1} parent=5 // pred_check
        %p167 = pneg %p166
      $region14: #{tpu_custom_call.1} parent=5 // pred_check_branch
        %169 = sbr.rel (%p167) target = $region16
      $region15: #{tpu_custom_call.1} parent=5 // pred_region
        // Predicated region
        $region17: #{tpu_custom_call.1} parent=15 // pred_check
          %p170 = pneg %p61
        $region18: #{tpu_custom_call.1} parent=15 // pred_check_branch
          %172 = sbr.rel (%p170) target = $region20
        $region19: #{tpu_custom_call.1} parent=15 // pred_region
          %s173 = sand.u32 %s51, 1
          %s174 = scalar_lea.sflag [#allocation3], %s173
          %s175 = sand.u32 %s51, 1
          %s176 = smul.addr %s175, 4
          %s177 = scalar_lea.vmem [#allocation2], %s176
          %s179 = ssub.s32 64, 64
          %180 = vsyncadd %s174, %s179
          %s181 = smul.addr %s26, 2
          %s182 = sadd.s32 %s27, %s181
          %s183 = smul.addr %s25, 2
          %s184 = sadd.s32 %s182, %s183
          %s185 = smul.addr %s184, 64
          %s186 = scalar_lea.hbm %s0, %s185
          %s188 = sshll.u32 %s177, 4
          %s189 = int_to_ptr.vmem [resolvable:$true] %s188
          %191 = dma.hbm_to_vmem [thread:$0]  %s186, 64, %s189, %s174
        $region20: #{tpu_custom_call.1} parent=15 // pred_fallthru
          _
        // Predicated region
        $region21: #{tpu_custom_call.1} parent=15 // pred_check
          %p192 = pneg %p89
        $region22: #{tpu_custom_call.1} parent=15 // pred_check_branch
          %194 = sbr.rel (%p192) target = $region24
        $region23: #{tpu_custom_call.1} parent=15 // pred_region
          %s195 = sand.u32 %s18, 1
          %s196 = scalar_lea.sflag [#allocation6], %s195
          %s197 = sand.u32 %s79, 1
          %s198 = smul.addr %s197, 4
          %s199 = scalar_lea.vmem [#allocation5], %s198
          %s201 = ssub.s32 64, 64
          %202 = vsyncadd %s196, %s201
          %s203 = sadd.s32 %s26, %s25
          %s204 = smul.addr %s203, 64
          %s205 = scalar_lea.hbm %s1, %s204
          %s207 = sshll.u32 %s199, 4
          %s208 = int_to_ptr.vmem [resolvable:$true] %s207
          %210 = dma.hbm_to_vmem [thread:$0]  %s205, 64, %s208, %s196
        $region24: #{tpu_custom_call.1} parent=15 // pred_fallthru
          _
        // Predicated region
        $region25: #{tpu_custom_call.1} parent=15 // pred_check
          %p211 = pneg %p115
        $region26: #{tpu_custom_call.1} parent=15 // pred_check_branch
          %213 = sbr.rel (%p211) target = $region28
        $region27: #{tpu_custom_call.1} parent=15 // pred_region
          %s214 = sand.u32 %s18, 1
          %s215 = scalar_lea.sflag [#allocation6], %s214
          %s216 = sand.u32 %s105, 1
          %s217 = smul.addr %s216, 64
          %s218 = scalar_lea.vmem [#allocation7], %s217
          %s220 = ssub.s32 1024, 1024
          %221 = vsyncadd %s215, %s220
          %s222 = smul.addr %s27, 128
          %s223 = scalar_lea.hbm %s2, %s222
          %s224 = sshll.u32 %s218, 4
          %s225 = int_to_ptr.vmem [resolvable:$true] %s224
          %230 = dma.hbm_to_vmem [thread:$0]  %s223, 1024, %s225, %s215, 256, 128, 8
        $region28: #{tpu_custom_call.1} parent=15 // pred_fallthru
          _
      $region16: #{tpu_custom_call.1} parent=5 // pred_fallthru
        _
      %p231 = scmp.le.s32.totalorder 1, %s18
      %p232 = scmp.lt.s32.totalorder %s18, 5
      %p233 = pnand %p231, %p232
      %p234 = pneg %p233
      // Predicated region
      $region29: #{tpu_custom_call.1} parent=5 // pred_check
        _
      $region30: #{tpu_custom_call.1} parent=5 // pred_check_branch
        %236 = sbr.rel (%p233) target = $region32
      $region31: #{tpu_custom_call.1} parent=5 // pred_region
        %s237 = ssub.s32 %s18, 1
        %s238 = sand.u32 %s54, 1
        %s239 = scalar_lea.sflag [#allocation3], %s238
        %s240 = sand.u32 %s54, 1
        %s241 = smul.addr %s240, 4
        %s242 = scalar_lea.vmem [#allocation2], %s241
        // Predicated region
        $region33: #{tpu_custom_call.1} parent=31 // pred_check
          %p243 = pneg %p67
        $region34: #{tpu_custom_call.1} parent=31 // pred_check_branch
          %245 = sbr.rel (%p243) target = $region36
        $region35: #{tpu_custom_call.1} parent=31 // pred_region
          %246 = dma.done %s239, 64
        $region36: #{tpu_custom_call.1} parent=31 // pred_fallthru
          _
        %s247 = sand.u32 %s23, 1
        %s248 = scalar_lea.sflag [#allocation6], %s247
        %s249 = sand.u32 %s82, 1
        %s250 = smul.addr %s249, 4
        %s251 = scalar_lea.vmem [#allocation5], %s250
        // Predicated region
        $region37: #{tpu_custom_call.1} parent=31 // pred_check
          %p252 = pneg %p95
        $region38: #{tpu_custom_call.1} parent=31 // pred_check_branch
          %254 = sbr.rel (%p252) target = $region40
        $region39: #{tpu_custom_call.1} parent=31 // pred_region
          %255 = dma.done %s248, 64
        $region40: #{tpu_custom_call.1} parent=31 // pred_fallthru
          _
        %s256 = sand.u32 %s23, 1
        %s257 = scalar_lea.sflag [#allocation6], %s256
        %s258 = sand.u32 %s108, 1
        %s259 = smul.addr %s258, 64
        %s260 = scalar_lea.vmem [#allocation7], %s259
        // Predicated region
        $region41: #{tpu_custom_call.1} parent=31 // pred_check
          %p261 = pneg %p121
        $region42: #{tpu_custom_call.1} parent=31 // pred_check_branch
          %263 = sbr.rel (%p261) target = $region44
        $region43: #{tpu_custom_call.1} parent=31 // pred_region
          %264 = dma.done %s257, 1024
        $region44: #{tpu_custom_call.1} parent=31 // pred_fallthru
          _
        %s265 = sand.u32 %s54, 1
        %s266 = scalar_lea.sflag [#allocation3], %s265
        %s267 = sand.u32 %s54, 1
        %s268 = smul.addr %s267, 4
        %s269 = scalar_lea.vmem [#allocation2], %s268
        %p270 = pneg %p67
        %p271 = pneg %p64
        %s272 = sand.u32 %s23, 1
        %s273 = scalar_lea.sflag [#allocation6], %s272
        %s274 = sand.u32 %s82, 1
        %s275 = smul.addr %s274, 4
        %s276 = scalar_lea.vmem [#allocation5], %s275
        %p277 = pneg %p95
        %p278 = pneg %p92
        %s279 = sand.u32 %s23, 1
        %s280 = scalar_lea.sflag [#allocation6], %s279
        %s281 = sand.u32 %s108, 1
        %s282 = smul.addr %s281, 64
        %s283 = scalar_lea.vmem [#allocation7], %s282
        %p284 = pneg %p121
        %p285 = pneg %p118
        %p286 = pneg %p151
        %p287 = pneg %p148
        %s288 = sand.u32 %s138, 1
        %s289 = scalar_lea.sflag [#allocation4], %s288
        %s290 = sand.u32 %s138, 1
        %s291 = smul.addr %s290, 4
        %s292 = scalar_lea.vmem [#allocation8], %s291
        %v293 = vld [vmem:[%s251] sm:$0xf]
        %v294 = vld [vmem:[%s260] sm:$0xff]
        %v295 = vld [vmem:[%s260 + $0x8] sm:$0xff]
        %v296 = vld [vmem:[%s260 + $0x10] sm:$0xff]
        %v297 = vld [vmem:[%s260 + $0x18] sm:$0xff]
        %v298 = vld [vmem:[%s260 + $0x20] sm:$0xff]
        %v299 = vld [vmem:[%s260 + $0x28] sm:$0xff]
        %v300 = vld [vmem:[%s260 + $0x30] sm:$0xff]
        %v301 = vld [vmem:[%s260 + $0x38] sm:$0xff]
        %vm302 = vcmask 523264
        %v304 = vsel %vm302, %v293, 0
        %306 = vmatprep.subr.mxu0 0.0
        %307 = vmatpush1.msra.mxu0 %v294
        %308 = vmatprep.subr.mxu0 0.0
        %309 = vmatpush1.msra.mxu0 %v295
        %310 = vmatprep.subr.mxu0 0.0
        %311 = vmatpush1.msra.mxu0 %v296
        %312 = vmatprep.subr.mxu0 0.0
        %313 = vmatpush1.msra.mxu0 %v297
        %314 = vmatprep.subr.mxu0 0.0
        %315 = vmatpush1.msra.mxu0 %v298
        %316 = vmatprep.subr.mxu0 0.0
        %317 = vmatpush1.msra.mxu0 %v299
        %318 = vmatprep.subr.mxu0 0.0
        %319 = vmatpush1.msra.mxu0 %v300
        %320 = vmatprep.subr.mxu0 0.0
        %321 = vmatpush1.msra.mxu0 %v301
        %322 = vmatprep.subr.mxu0 0.0
        %323 = vmatpush1.msra.mxu0 0.0
        %324 = vmatprep.subr.mxu0 0.0
        %325 = vmatpush1.msra.mxu0 0.0
        %326 = vmatprep.subr.mxu0 0.0
        %327 = vmatpush1.msra.mxu0 0.0
        %328 = vmatprep.subr.mxu0 0.0
        %329 = vmatpush1.msra.mxu0 0.0
        %330 = vmatprep.subr.mxu0 0.0
        %331 = vmatpush1.msra.mxu0 0.0
        %332 = vmatprep.subr.mxu0 0.0
        %333 = vmatpush1.msra.mxu0 0.0
        %334 = vmatprep.subr.mxu0 0.0
        %335 = vmatpush1.msra.mxu0 0.0
        %336 = vmatprep.subr.mxu0 0.0
        %337 = vmatpush1.msra.mxu0 0.0
        %338 = vmatprep.subr.mxu0 0.0
        %339 = vmatpush1.msra.mxu0 0.0
        %340 = vmatprep.subr.mxu0 0.0
        %341 = vmatpush1.msra.mxu0 0.0
        %342 = vmatprep.subr.mxu0 0.0
        %343 = vmatpush1.msra.mxu0 0.0
        %344 = vmatprep.subr.mxu0 0.0
        %345 = vmatpush1.msra.mxu0 0.0
        %346 = vmatprep.subr.mxu0 0.0
        %347 = vmatpush1.msra.mxu0 0.0
        %348 = vmatprep.subr.mxu0 0.0
        %349 = vmatpush1.msra.mxu0 0.0
        %350 = vmatprep.subr.mxu0 0.0
        %351 = vmatpush1.msra.mxu0 0.0
        %352 = vmatprep.subr.mxu0 0.0
        %353 = vmatpush1.msra.mxu0 0.0
        %354 = vmatprep.subr.mxu0 0.0
        %355 = vmatpush1.msra.mxu0 0.0
        %356 = vmatprep.subr.mxu0 0.0
        %357 = vmatpush1.msra.mxu0 0.0
        %358 = vmatprep.subr.mxu0 0.0
        %359 = vmatpush1.msra.mxu0 0.0
        %360 = vmatprep.subr.mxu0 0.0
        %361 = vmatpush1.msra.mxu0 0.0
        %362 = vmatprep.subr.mxu0 0.0
        %363 = vmatpush1.msra.mxu0 0.0
        %364 = vmatprep.subr.mxu0 0.0
        %365 = vmatpush1.msra.mxu0 0.0
        %366 = vmatprep.subr.mxu0 0.0
        %367 = vmatpush1.msra.mxu0 0.0
        %368 = vmatprep.subr.mxu0 0.0
        %369 = vmatpush1.msra.mxu0 0.0
        %370 = vmatprep.mubr.f32.mxu0 0.0
        %371 = vmatmul.mubr.f32.gmra.mrb[0].mxu0 %v304
        %v372 = vpop.f32.mrb[0].mxu0
        %v373 = vadd.f32 0.0, %v372
        %v374 = vpop.f32.mrb[0].mxu0
        %375 = vdwg.mxu0
        %v376 = vxor.u32 %v373, 2147483648
        %v377 = vmul.f32 %v376, 1.442695
        %v378 = vpow.pop %v377
        %v379 = vadd.f32 %v378, 1.0
        %v380 = vrcp.pop %v379
        %v381 = vmul.f32 1.0, %v380
        %v382 = vld [vmem:[%s242] sm:$0xf]
        %v383 = vadd.f32 %v381, 1.0
        %v384 = vmul.f32 %v382, %v383
        %385 = vst [vmem:[%s292] sm:$0xf] %v384
        %s386 = sand.u32 %s138, 1
        %s387 = scalar_lea.sflag [#allocation4], %s386
        %s388 = sand.u32 %s138, 1
        %s389 = smul.addr %s388, 4
        %s390 = scalar_lea.vmem [#allocation8], %s389
        // Predicated region
        $region45: #{tpu_custom_call.1} parent=31 // pred_check
          %p391 = pneg %p148
        $region46: #{tpu_custom_call.1} parent=31 // pred_check_branch
          %393 = sbr.rel (%p391) target = $region48
        $region47: #{tpu_custom_call.1} parent=31 // pred_region
          %s395 = ssub.s32 64, 64
          %396 = vsyncadd %s387, %s395
          %s397 = smul.addr %s29, 2
          %s398 = sadd.s32 %s30, %s397
          %s399 = smul.addr %s28, 2
          %s400 = sadd.s32 %s398, %s399
          %s401 = smul.addr %s400, 64
          %s402 = scalar_lea.hbm %s3, %s401
          %s404 = sshll.u32 %s390, 4
          %s405 = int_to_ptr.vmem [resolvable:$true] %s404
          %407 = dma.vmem_to_hbm [thread:$0]  %s405, 64, %s402, %s387
        $region48: #{tpu_custom_call.1} parent=31 // pred_fallthru
          _
      $region32: #{tpu_custom_call.1} parent=5 // pred_fallthru
        _
      %p408 = scmp.le.s32.totalorder 2, %s18
      // Predicated region
      $region49: #{tpu_custom_call.1} parent=5 // pred_check
        %p409 = pneg %p408
      $region50: #{tpu_custom_call.1} parent=5 // pred_check_branch
        %411 = sbr.rel (%p409) target = $region52
      $region51: #{tpu_custom_call.1} parent=5 // pred_region
        %s412 = ssub.s32 %s18, 2
        // Predicated region
        $region53: #{tpu_custom_call.1} parent=51 // pred_check
          %p413 = pneg %p154
        $region54: #{tpu_custom_call.1} parent=51 // pred_check_branch
          %415 = sbr.rel (%p413) target = $region56
        $region55: #{tpu_custom_call.1} parent=51 // pred_region
          %s416 = sand.u32 %s139, 1
          %s417 = scalar_lea.sflag [#allocation4], %s416
          %s418 = sand.u32 %s139, 1
          %s419 = smul.addr %s418, 4
          %s420 = scalar_lea.vmem [#allocation8], %s419
          %421 = dma.done %s417, 64
        $region56: #{tpu_custom_call.1} parent=51 // pred_fallthru
          _
      $region52: #{tpu_custom_call.1} parent=5 // pred_fallthru
        _
    $region6: #{tpu_custom_call.1} parent=1 // loop_footer
      %s22 = sadd.s32 1, %s18
    $region7: #{tpu_custom_call.1} parent=1 // loop_footer_branch
      %17 = sbr.rel target = $region3
    $region8: #{tpu_custom_call.1} parent=1 // loop_exit
      _
    %422 = vsyncpa [#allocation3], 1
    %s423 = scalar_lea.sflag [#allocation3], 1
    %424 = vsyncpa %s423, 1
    %425 = vsyncpa [#allocation6], 1
    %s426 = scalar_lea.sflag [#allocation6], 1
    %427 = vsyncpa %s426, 1
    %428 = vsyncpa [#allocation4], 1
    %s429 = scalar_lea.sflag [#allocation4], 1
    %430 = vsyncpa %s429, 1

</llo_original>
